<compile_context>
chip_gen: v5e
topology: v5e:2x2
jax: 0.10.0
libtpu: 0.0.40
codegen_flags: <defaults>
</compile_context>

<pallas_src>
import functools

import jax
import jax.numpy as jnp
from jax.experimental import pallas as pl
from jax.experimental.pallas import tpu as pltpu


def se_kernel(x_ref, w1_ref, b1_ref, w2_ref, b2_ref, o_ref):
    # --- squeeze: global average pool over spatial (AdaptiveAvgPool2d(1)) ---
    s = jnp.mean(x_ref[...].astype(jnp.float32), axis=2)            # (Nb, C)

    # --- excitation: fc1 + ReLU, fc2 + Sigmoid (batched matmuls on the MXU) ---
    h = jnp.dot(s, w1_ref[...], preferred_element_type=jnp.float32) + b1_ref[...]
    h = jnp.maximum(h, 0.0)                                          # (Nb, Cr)
    z = jnp.dot(h, w2_ref[...], preferred_element_type=jnp.float32) + b2_ref[...]
    scale = jax.nn.sigmoid(z).astype(o_ref.dtype)                    # (Nb, C)

    # --- scale: re-read x from VMEM (don't hold the big tile live across the matmuls) ---
    o_ref[...] = x_ref[...] * scale[:, :, None]


def _pick_batch_block(N, bytes_per_image, target_bytes=2 << 20, vmem_budget=24 << 20):
    """Images per grid step: ~2 MiB block, v7x-safe VMEM, batch-divisible."""
    nb = max(1, min(N, target_bytes // max(bytes_per_image, 1)))
    # double-buffered input + output blocks must fit well under scoped VMEM
    nb = max(1, min(nb, vmem_budget // (4 * max(bytes_per_image, 1))))
    # keep at least 2 grid steps so both v7x TensorCores have work
    if nb >= N and N >= 2:
        nb = (N + 1) // 2
    # make the block tile the batch exactly
    while N % nb != 0:
        nb -= 1
    return nb


@jax.jit
def se_module(x, w1, b1, w2, b2):
    """x: (N, C, H, W). w1: (Cr, C), b1: (Cr,), w2: (C, Cr), b2: (C,)."""
    N, C, H, W = x.shape
    Cr = w1.shape[0]
    HW = H * W
    itemsize = x.dtype.itemsize

    # Natural NCHW flat view: free reshape, no extra HBM passes.
    x3 = x.reshape(N, C, HW)
    nb = _pick_batch_block(N, C * HW * itemsize)

    # Pre-transpose the tiny 1x1-conv weights so in-kernel dots are row-major.
    w1t = w1.T.astype(jnp.float32)           # (C, Cr)
    w2t = w2.T.astype(jnp.float32)           # (Cr, C)
    b1r = b1.reshape(1, Cr).astype(jnp.float32)
    b2r = b2.reshape(1, C).astype(jnp.float32)

    cost = pl.CostEstimate(
        flops=2 * N * C * HW + 4 * N * C * Cr,
        transcendentals=N * C,
        bytes_accessed=2 * N * C * HW * itemsize + (2 * C * Cr + C + Cr) * 4,
    )

    out = pl.pallas_call(
        se_kernel,
        out_shape=jax.ShapeDtypeStruct(x3.shape, x.dtype),
        grid_spec=pltpu.PrefetchScalarGridSpec(
            num_scalar_prefetch=0,
            grid=(N // nb,),
            in_specs=[
                pl.BlockSpec((nb, C, HW), lambda n: (n, 0, 0)),
                pl.BlockSpec((C, Cr), lambda n: (0, 0)),   # w1.T  (resident)
                pl.BlockSpec((1, Cr), lambda n: (0, 0)),   # b1    (resident)
                pl.BlockSpec((Cr, C), lambda n: (0, 0)),   # w2.T  (resident)
                pl.BlockSpec((1, C), lambda n: (0, 0)),    # b2    (resident)
            ],
            out_specs=pl.BlockSpec((nb, C, HW), lambda n: (n, 0, 0)),
        ),
        compiler_params=pltpu.CompilerParams(
            dimension_semantics=("parallel",),
            vmem_limit_bytes=32 * 1024 * 1024,
        ),
        cost_estimate=cost,
    )(x3, w1t, b1r, w2t, b2r)

    return out.reshape(N, C, H, W)


def se_reference(x, w1, b1, w2, b2):
    s = jnp.mean(x, axis=(2, 3), keepdims=True)                       # (N, C, 1, 1)
    h = jnp.einsum("rc,ncij->nrij", w1, s) + b1[None, :, None, None]
    h = jnp.maximum(h, 0.0)
    z = jnp.einsum("cr,nrij->ncij", w2, h) + b2[None, :, None, None]
    return x * jax.nn.sigmoid(z)


if __name__ == "__main__":
    def run_case(N, C, H, W, reduction, key):
        Cr = C // reduction
        kx, k1, k2, k3, k4 = jax.random.split(key, 5)
        x = jax.random.normal(kx, (N, C, H, W), dtype=jnp.float32)
        w1 = jax.random.normal(k1, (Cr, C), dtype=jnp.float32) * 0.1
        b1 = jax.random.normal(k2, (Cr,), dtype=jnp.float32) * 0.1
        w2 = jax.random.normal(k3, (C, Cr), dtype=jnp.float32) * 0.1
        b2 = jax.random.normal(k4, (C,), dtype=jnp.float32) * 0.1
        out = jax.block_until_ready(se_module(x, w1, b1, w2, b2))
        ref = se_reference(x, w1, b1, w2, b2)
        assert out.shape == x.shape
        assert jnp.allclose(out, ref, atol=1e-5, rtol=1e-5), "mismatch vs reference"

    key = jax.random.PRNGKey(0)
    k1, k2, k3 = jax.random.split(key, 3)

    # SEModule(channels=32, reduction=4), 16x16 maps  -> lane-aligned HW path
    run_case(2, 32, 16, 16, 4, k1)
    # SEModule(channels=128, reduction=8), 7x7 maps   -> non-aligned HW, NCHW kept (no transpose)
    run_case(2, 128, 7, 7, 8, k2)
    # SEModule(channels=24, reduction=4), 14x14 maps  -> nothing 128-aligned, still correct
    run_case(3, 24, 14, 14, 4, k3)

    print("KERNEL_OK")
</pallas_src>

<mosaic_0001>
module attributes {stable_mosaic.version = 11 : i64} {
  func.func @se_kernel(%arg0: i32, %arg1: memref<1x32x256xf32, #tpu.memory_space<vmem>>, %arg2: memref<32x8xf32, #tpu.memory_space<vmem>>, %arg3: memref<1x8xf32, #tpu.memory_space<vmem>>, %arg4: memref<8x32xf32, #tpu.memory_space<vmem>>, %arg5: memref<1x32xf32, #tpu.memory_space<vmem>>, %arg6: memref<1x32x256xf32, #tpu.memory_space<vmem>>) attributes {dimension_semantics = [#tpu.dimension_semantics<parallel>], iteration_bounds = array<i64: 2>, scalar_prefetch = 0 : i64, scratch_operands = 0 : i64, tpu.core_type = #tpu.core_type<tc>, window_params = [{transform_indices = @transform_0, window_bounds = array<i64: 1, 32, 256>}, {pipeline_mode = #tpu.pipeline_mode<synchronous>, transform_indices = @transform_1, window_bounds = array<i64: 32, 8>}, {pipeline_mode = #tpu.pipeline_mode<synchronous>, transform_indices = @transform_2, window_bounds = array<i64: 1, 8>}, {pipeline_mode = #tpu.pipeline_mode<synchronous>, transform_indices = @transform_3, window_bounds = array<i64: 8, 32>}, {pipeline_mode = #tpu.pipeline_mode<synchronous>, transform_indices = @transform_4, window_bounds = array<i64: 1, 32>}, {transform_indices = @transform_5, window_bounds = array<i64: 1, 32, 256>}]} {
    %c0 = arith.constant 0 : index
    %c0_0 = arith.constant 0 : index
    %c0_1 = arith.constant 0 : index
    %0 = vector.load %arg1[%c0, %c0_0, %c0_1] : memref<1x32x256xf32, #tpu.memory_space<vmem>>, vector<1x32x256xf32>
    %cst = arith.constant dense<0.000000e+00> : vector<1x32xf32>
    %1 = vector.multi_reduction <add>, %0, %cst [2] : vector<1x32x256xf32> to vector<1x32xf32>
    %cst_2 = arith.constant 2.560000e+02 : f32
    %2 = vector.broadcast %cst_2 : f32 to vector<1x32xf32>
    %3 = arith.divf %1, %2 : vector<1x32xf32>
    %c0_3 = arith.constant 0 : index
    %c0_4 = arith.constant 0 : index
    %4 = vector.load %arg2[%c0_3, %c0_4] : memref<32x8xf32, #tpu.memory_space<vmem>>, vector<32x8xf32>
    %cst_5 = arith.constant dense<0.000000e+00> : vector<1x8xf32>
    %5 = tpu.matmul %3, %4, %cst_5 {dimension_numbers = #tpu.dot_dimension_numbers<[1], [0], [0], [1], [0, 0, 1, 1], [], []>} : vector<1x32xf32>, vector<32x8xf32>, vector<1x8xf32> -> vector<1x8xf32>
    %c0_6 = arith.constant 0 : index
    %c0_7 = arith.constant 0 : index
    %6 = vector.load %arg3[%c0_6, %c0_7] : memref<1x8xf32, #tpu.memory_space<vmem>>, vector<1x8xf32>
    %7 = arith.addf %5, %6 : vector<1x8xf32>
    %cst_8 = arith.constant 0.000000e+00 : f32
    %8 = vector.broadcast %cst_8 : f32 to vector<1x8xf32>
    %9 = arith.maximumf %7, %8 : vector<1x8xf32>
    %c0_9 = arith.constant 0 : index
    %c0_10 = arith.constant 0 : index
    %10 = vector.load %arg4[%c0_9, %c0_10] : memref<8x32xf32, #tpu.memory_space<vmem>>, vector<8x32xf32>
    %cst_11 = arith.constant dense<0.000000e+00> : vector<1x32xf32>
    %11 = tpu.matmul %9, %10, %cst_11 {dimension_numbers = #tpu.dot_dimension_numbers<[1], [0], [0], [1], [0, 0, 1, 1], [], []>} : vector<1x8xf32>, vector<8x32xf32>, vector<1x32xf32> -> vector<1x32xf32>
    %c0_12 = arith.constant 0 : index
    %c0_13 = arith.constant 0 : index
    %12 = vector.load %arg5[%c0_12, %c0_13] : memref<1x32xf32, #tpu.memory_space<vmem>>, vector<1x32xf32>
    %13 = arith.addf %11, %12 : vector<1x32xf32>
    %14 = arith.negf %13 : vector<1x32xf32>
    %15 = math.exp %14 : vector<1x32xf32>
    %cst_14 = arith.constant 1.000000e+00 : f32
    %16 = vector.broadcast %cst_14 : f32 to vector<1x32xf32>
    %17 = arith.addf %16, %15 : vector<1x32xf32>
    %18 = arith.divf %16, %17 : vector<1x32xf32>
    %c0_15 = arith.constant 0 : index
    %c0_16 = arith.constant 0 : index
    %c0_17 = arith.constant 0 : index
    %19 = vector.load %arg1[%c0_15, %c0_16, %c0_17] : memref<1x32x256xf32, #tpu.memory_space<vmem>>, vector<1x32x256xf32>
    %20 = vector.shape_cast %18 : vector<1x32xf32> to vector<1x32x1xf32>
    %21 = vector.broadcast %20 : vector<1x32x1xf32> to vector<1x32x256xf32>
    %22 = arith.mulf %19, %21 : vector<1x32x256xf32>
    %c0_18 = arith.constant 0 : index
    %c0_19 = arith.constant 0 : index
    %c0_20 = arith.constant 0 : index
    %23 = vector.load %arg6[%c0_18, %c0_19, %c0_20] : memref<1x32x256xf32, #tpu.memory_space<vmem>>, vector<1x32x256xf32>
    tpu.vector_store %arg6[%c0_18, %c0_19, %c0_20], %22 {strides = array<i32>} : memref<1x32x256xf32, #tpu.memory_space<vmem>>, vector<1x32x256xf32>,
    return
  }
  func.func @transform_0(%arg0: i32) -> (i32, i32, i32) {
    %c0_i32 = arith.constant 0 : i32
    %c0_i32_0 = arith.constant 0 : i32
    %c0_i32_1 = arith.constant 0 : i32
    return %arg0, %c0_i32, %c0_i32_0 : i32, i32, i32
  }
  func.func @transform_1(%arg0: i32) -> (i32, i32) {
    %c0_i32 = arith.constant 0 : i32
    %c0_i32_0 = arith.constant 0 : i32
    %c0_i32_1 = arith.constant 0 : i32
    return %c0_i32, %c0_i32_0 : i32, i32
  }
  func.func @transform_2(%arg0: i32) -> (i32, i32) {
    %c0_i32 = arith.constant 0 : i32
    %c0_i32_0 = arith.constant 0 : i32
    %c0_i32_1 = arith.constant 0 : i32
    return %c0_i32, %c0_i32_0 : i32, i32
  }
  func.func @transform_3(%arg0: i32) -> (i32, i32) {
    %c0_i32 = arith.constant 0 : i32
    %c0_i32_0 = arith.constant 0 : i32
    %c0_i32_1 = arith.constant 0 : i32
    return %c0_i32, %c0_i32_0 : i32, i32
  }
  func.func @transform_4(%arg0: i32) -> (i32, i32) {
    %c0_i32 = arith.constant 0 : i32
    %c0_i32_0 = arith.constant 0 : i32
    %c0_i32_1 = arith.constant 0 : i32
    return %c0_i32, %c0_i32_0 : i32, i32
  }
  func.func @transform_5(%arg0: i32) -> (i32, i32, i32) {
    %c0_i32 = arith.constant 0 : i32
    %c0_i32_0 = arith.constant 0 : i32
    %c0_i32_1 = arith.constant 0 : i32
    return %arg0, %c0_i32, %c0_i32_0 : i32, i32, i32
  }
}

</mosaic_0001>

<llo_original>
// kernel: se_module.1
$region0: #{se_module.1}
  #allocation0 [shape = 'u32[]', space=smem, size = 0x4, offset = 0x4, fixed_abs, tag = 'smem constant byte address 0x4 - core index']
  #allocation1 [shape = 'u32[72,128]{1,0:T(1,128)}', space=vmem, size = 0x9000, scoped, tag = 'internal scratch']
  %s0 = inlined_call_operand.vmem [shape: f32[2,32,256], index: 0, kind: input, shape index: {}]
  %s1 = inlined_call_operand.vmem [shape: f32[32,8], index: 1, kind: input, shape index: {}]
  %s2 = inlined_call_operand.vmem [shape: f32[1,8], index: 2, kind: input, shape index: {}]
  %s3 = inlined_call_operand.vmem [shape: f32[8,32], index: 3, kind: input, shape index: {}]
  %s4 = inlined_call_operand.vmem [shape: f32[1,32], index: 4, kind: input, shape index: {}]
  %s5 = inlined_call_operand.vmem [shape: f32[2,32,256], index: 5, kind: output, shape index: {}]
  %s6 = sld [smem:[#allocation0]]
  $region53: #{se_module.1} parent=0
    _
  %s8 = ssub.s32 1, %s6
  %s9 = scalar_select 0, %s8, %s6
  loop: start=0, step=1, limit=4
  $region2: #{se_module.1} parent=0 // loop_pre_header
    _
  $region3: #{se_module.1} parent=0 // loop_header
    %s11 = sphi 0, %s15
    %p12 = scmp.ge.s32.totalorder %s11, 4
    %s21 = sphi 0, %s23
    %s24 = sphi 0, %s21
    %s25 = sphi 0, %s24
    %s41 = sphi 0, %s25
    %s45 = sphi 0, %s45
    %s47 = sphi 0, %s45
    %s48 = sphi 0, %s47
    %s62 = sphi 0, %s48
    %s66 = sphi 0, %s66
    %s68 = sphi 0, %s66
    %s69 = sphi 0, %s68
    %s83 = sphi 0, %s69
    %s87 = sphi 0, %s87
    %s89 = sphi 0, %s87
    %s90 = sphi 0, %s89
    %s104 = sphi 0, %s90
    %s108 = sphi 0, %s108
    %s110 = sphi 0, %s108
    %s111 = sphi 0, %s110
    %s125 = sphi 0, %s111
    %s131 = sphi 0, %s133
    %s134 = sphi 0, %s131
    %s135 = sphi 0, %s134
    %s151 = sphi 0, %s135
  $region4: #{se_module.1} parent=0 // loop_header_branch
    %14 = sbr.rel (%p12) target = $region8
  $region5: #{se_module.1} parent=0 // loop_body
    %s16 = ssub.s32 %s11, 1
    %s17 = ssub.s32 %s11, 2
    %s18 = sadd.s32 %s11, 1
    %s19 = ssub.s32 %s11, %s18
    %p20 = scmp.eq.s32.totalorder %s19, 0
    %s22 = sadd.s32 %s21, 1
    %s23 = scalar_select %p20, %s21, %s22
    %p26 = pneg %p20
    %p27 = scmp.eq.s32.totalorder %s11, 1
    %p28 = por %p26, %p27
    %p29 = scmp.ne.s32.totalorder %s21, %s24
    %p30 = scmp.eq.s32.totalorder %s11, 0
    %p31 = por %p29, %p30
    %p32 = scmp.ne.s32.totalorder %s21, %s24
    %p33 = scmp.eq.s32.totalorder %s16, 1
    %p34 = por %p32, %p33
    %p35 = scmp.ne.s32.totalorder %s24, %s25
    %p36 = scmp.eq.s32.totalorder %s16, 0
    %p37 = por %p35, %p36
    %p38 = scmp.ne.s32.totalorder %s24, %s25
    %p39 = scmp.eq.s32.totalorder %s17, 1
    %p40 = por %p38, %p39
    %p42 = scmp.ne.s32.totalorder %s25, %s41
    %p43 = scmp.eq.s32.totalorder %s17, 0
    %p44 = por %p42, %p43
    %s46 = sadd.s32 %s45, 1
    %p49 = scmp.eq.s32.totalorder %s11, 1
    %p50 = scmp.ne.s32.totalorder %s45, %s47
    %p51 = scmp.eq.s32.totalorder %s11, 0
    %p52 = por %p50, %p51
    %p53 = scmp.ne.s32.totalorder %s45, %s47
    %p54 = scmp.eq.s32.totalorder %s16, 1
    %p55 = por %p53, %p54
    %p56 = scmp.ne.s32.totalorder %s47, %s48
    %p57 = scmp.eq.s32.totalorder %s16, 0
    %p58 = por %p56, %p57
    %p59 = scmp.ne.s32.totalorder %s47, %s48
    %p60 = scmp.eq.s32.totalorder %s17, 1
    %p61 = por %p59, %p60
    %p63 = scmp.ne.s32.totalorder %s48, %s62
    %p64 = scmp.eq.s32.totalorder %s17, 0
    %p65 = por %p63, %p64
    %s67 = sadd.s32 %s66, 1
    %p70 = scmp.eq.s32.totalorder %s11, 1
    %p71 = scmp.ne.s32.totalorder %s66, %s68
    %p72 = scmp.eq.s32.totalorder %s11, 0
    %p73 = por %p71, %p72
    %p74 = scmp.ne.s32.totalorder %s66, %s68
    %p75 = scmp.eq.s32.totalorder %s16, 1
    %p76 = por %p74, %p75
    %p77 = scmp.ne.s32.totalorder %s68, %s69
    %p78 = scmp.eq.s32.totalorder %s16, 0
    %p79 = por %p77, %p78
    %p80 = scmp.ne.s32.totalorder %s68, %s69
    %p81 = scmp.eq.s32.totalorder %s17, 1
    %p82 = por %p80, %p81
    %p84 = scmp.ne.s32.totalorder %s69, %s83
    %p85 = scmp.eq.s32.totalorder %s17, 0
    %p86 = por %p84, %p85
    %s88 = sadd.s32 %s87, 1
    %p91 = scmp.eq.s32.totalorder %s11, 1
    %p92 = scmp.ne.s32.totalorder %s87, %s89
    %p93 = scmp.eq.s32.totalorder %s11, 0
    %p94 = por %p92, %p93
    %p95 = scmp.ne.s32.totalorder %s87, %s89
    %p96 = scmp.eq.s32.totalorder %s16, 1
    %p97 = por %p95, %p96
    %p98 = scmp.ne.s32.totalorder %s89, %s90
    %p99 = scmp.eq.s32.totalorder %s16, 0
    %p100 = por %p98, %p99
    %p101 = scmp.ne.s32.totalorder %s89, %s90
    %p102 = scmp.eq.s32.totalorder %s17, 1
    %p103 = por %p101, %p102
    %p105 = scmp.ne.s32.totalorder %s90, %s104
    %p106 = scmp.eq.s32.totalorder %s17, 0
    %p107 = por %p105, %p106
    %s109 = sadd.s32 %s108, 1
    %p112 = scmp.eq.s32.totalorder %s11, 1
    %p113 = scmp.ne.s32.totalorder %s108, %s110
    %p114 = scmp.eq.s32.totalorder %s11, 0
    %p115 = por %p113, %p114
    %p116 = scmp.ne.s32.totalorder %s108, %s110
    %p117 = scmp.eq.s32.totalorder %s16, 1
    %p118 = por %p116, %p117
    %p119 = scmp.ne.s32.totalorder %s110, %s111
    %p120 = scmp.eq.s32.totalorder %s16, 0
    %p121 = por %p119, %p120
    %p122 = scmp.ne.s32.totalorder %s110, %s111
    %p123 = scmp.eq.s32.totalorder %s17, 1
    %p124 = por %p122, %p123
    %p126 = scmp.ne.s32.totalorder %s111, %s125
    %p127 = scmp.eq.s32.totalorder %s17, 0
    %p128 = por %p126, %p127
    %s129 = ssub.s32 %s11, %s18
    %p130 = scmp.eq.s32.totalorder %s129, 0
    %s132 = sadd.s32 %s131, 1
    %s133 = scalar_select %p130, %s131, %s132
    %p136 = pneg %p130
    %p137 = scmp.eq.s32.totalorder %s11, 1
    %p138 = por %p136, %p137
    %p139 = scmp.ne.s32.totalorder %s131, %s134
    %p140 = scmp.eq.s32.totalorder %s11, 0
    %p141 = por %p139, %p140
    %p142 = scmp.ne.s32.totalorder %s131, %s134
    %p143 = scmp.eq.s32.totalorder %s16, 1
    %p144 = por %p142, %p143
    %p145 = scmp.ne.s32.totalorder %s134, %s135
    %p146 = scmp.eq.s32.totalorder %s16, 0
    %p147 = por %p145, %p146
    %p148 = scmp.ne.s32.totalorder %s134, %s135
    %p149 = scmp.eq.s32.totalorder %s17, 1
    %p150 = por %p148, %p149
    %p152 = scmp.ne.s32.totalorder %s135, %s151
    %p153 = scmp.eq.s32.totalorder %s17, 0
    %p154 = por %p152, %p153
    %p155 = scmp.le.s32.totalorder 1, %s11
    %p156 = scmp.lt.s32.totalorder %s11, 3
    %p157 = pnand %p155, %p156
    %p158 = pneg %p157
    // Predicated region
    $region9: #{se_module.1} parent=5 // pred_check
      _
    $region10: #{se_module.1} parent=5 // pred_check_branch
      %160 = sbr.rel (%p157) target = $region12
    $region11: #{se_module.1} parent=5 // pred_region
      %s161 = ssub.s32 %s11, 1
      // Predicated region
      $region13: #{se_module.1} parent=11 // pred_check
        %p162 = pneg %p58
      $region14: #{se_module.1} parent=11 // pred_check_branch
        %164 = sbr.rel (%p162) target = $region16
      $region15: #{se_module.1} parent=11 // pred_region
        _
      $region16: #{se_module.1} parent=11 // pred_fallthru
        _
      // Predicated region
      $region17: #{se_module.1} parent=11 // pred_check
        %p165 = pneg %p79
      $region18: #{se_module.1} parent=11 // pred_check_branch
        %167 = sbr.rel (%p165) target = $region20
      $region19: #{se_module.1} parent=11 // pred_region
        _
      $region20: #{se_module.1} parent=11 // pred_fallthru
        _
      // Predicated region
      $region21: #{se_module.1} parent=11 // pred_check
        %p168 = pneg %p100
      $region22: #{se_module.1} parent=11 // pred_check_branch
        %170 = sbr.rel (%p168) target = $region24
      $region23: #{se_module.1} parent=11 // pred_region
        _
      $region24: #{se_module.1} parent=11 // pred_fallthru
        _
      // Predicated region
      $region25: #{se_module.1} parent=11 // pred_check
        %p171 = pneg %p121
      $region26: #{se_module.1} parent=11 // pred_check_branch
        %173 = sbr.rel (%p171) target = $region28
      $region27: #{se_module.1} parent=11 // pred_region
        _
      $region28: #{se_module.1} parent=11 // pred_fallthru
        _
    $region12: #{se_module.1} parent=5 // pred_fallthru
      _
    %p174 = scmp.lt.s32.totalorder %s11, 2
    // Predicated region
    $region29: #{se_module.1} parent=5 // pred_check
      %p175 = pneg %p174
    $region30: #{se_module.1} parent=5 // pred_check_branch
      %177 = sbr.rel (%p175) target = $region32
    $region31: #{se_module.1} parent=5 // pred_region
      // Predicated region
      $region33: #{se_module.1} parent=31 // pred_check
        %p178 = pneg %p31
      $region34: #{se_module.1} parent=31 // pred_check_branch
        %180 = sbr.rel (%p178) target = $region36
      $region35: #{se_module.1} parent=31 // pred_region
        %p181 = scmp.lt.s32.totalorder %s11, 1
        %s182 = scalar_select %p181, %s11, 1
        %s183 = smul.addr %s182, 8
        %s184 = smul.addr %s183, 8
        %s185 = scalar_lea.vmem %s0, %s184
      $region36: #{se_module.1} parent=31 // pred_fallthru
        _
    $region32: #{se_module.1} parent=5 // pred_fallthru
      _
    %p186 = scmp.le.s32.totalorder 1, %s11
    %p187 = scmp.lt.s32.totalorder %s11, 3
    %p188 = pnand %p186, %p187
    %p189 = pneg %p188
    // Predicated region
    $region37: #{se_module.1} parent=5 // pred_check
      _
    $region38: #{se_module.1} parent=5 // pred_check_branch
      %191 = sbr.rel (%p188) target = $region40
    $region39: #{se_module.1} parent=5 // pred_region
      %s192 = ssub.s32 %s11, 1
      %p193 = scmp.lt.s32.totalorder %s16, 1
      %s194 = scalar_select %p193, %s16, 1
      %s195 = smul.addr %s194, 8
      %s196 = smul.addr %s195, 8
      %s197 = scalar_lea.vmem %s0, %s196
      %p198 = pneg %p37
      %p199 = pneg %p34
      %p200 = pneg %p58
      %p201 = pneg %p55
      %p202 = pneg %p79
      %p203 = pneg %p76
      %p204 = pneg %p100
      %p205 = pneg %p97
      %p206 = pneg %p121
      %p207 = pneg %p118
      %p208 = pneg %p147
      %p209 = pneg %p144
      %p210 = scmp.lt.s32.totalorder %s16, 1
      %s211 = scalar_select %p210, %s16, 1
      %s212 = smul.addr %s211, 8
      %s213 = smul.addr %s212, 8
      %s214 = scalar_lea.vmem %s5, %s213
      %p215 = scmp.lt.s32.totalorder %s16, 1
      %s216 = scalar_select %p215, %s16, 1
      %s217 = smul.addr %s216, 8
      %s218 = smul.addr %s217, 8
      %s219 = scalar_lea.vmem %s0, %s218
      %p220 = scmp.lt.s32.totalorder %s16, 1
      %s221 = scalar_select %p220, %s16, 1
      %s222 = smul.addr %s221, 8
      %s223 = smul.addr %s222, 8
      %s224 = scalar_lea.vmem %s5, %s223
      %v225 = vld [vmem:[%s219] sm:$0xff]
      %v226 = vld [vmem:[%s219 + $0x8] sm:$0xff]
      %v227 = vld [vmem:[%s219 + $0x10] sm:$0xff]
      %v228 = vld [vmem:[%s219 + $0x18] sm:$0xff]
      %v229 = vld [vmem:[%s219 + $0x20] sm:$0xff]
      %v230 = vld [vmem:[%s219 + $0x28] sm:$0xff]
      %v231 = vld [vmem:[%s219 + $0x30] sm:$0xff]
      %v232 = vld [vmem:[%s219 + $0x38] sm:$0xff]
      %v233 = vadd.f32 %v225, %v226
      %234 = vadd.xlane.f32.xlu0 %v233
      %v235 = vpop.xlane.xlu0 %234
      %v236 = vadd.f32 %v227, %v228
      %237 = vadd.xlane.f32.xlu0 %v236
      %v238 = vpop.xlane.xlu0 %237
      %v239 = vadd.f32 %v229, %v230
      %240 = vadd.xlane.f32.xlu0 %v239
      %v241 = vpop.xlane.xlu0 %240
      %v242 = vadd.f32 %v231, %v232
      %243 = vadd.xlane.f32.xlu0 %v242
      %v244 = vpop.xlane.xlu0 %243
      %v245 = vrcp.pop 256.0
      %v246 = vmul.f32 256.0, %v245
      %v247 = vsub.f32 1.0, %v246
      %v248 = vmul.f32 %v245, %v247
      %v249 = vadd.f32 %v245, %v248
      %vm250 = vweird.f32 %v245
      %v251 = vsel %vm250, %v245, %v249
      %v252 = vmul.f32 %v235, %v251
      %v253 = vmul.f32 %v238, %v251
      %v254 = vmul.f32 %v241, %v251
      %v255 = vmul.f32 %v244, %v251
      %v256 = vld [vmem:[%s1] sm:$0xff]
      %v257 = vld [vmem:[%s1 + $0x8] sm:$0xff]
      %v258 = vld [vmem:[%s1 + $0x10] sm:$0xff]
      %v259 = vld [vmem:[%s1 + $0x18] sm:$0xff]
      %v260 = vld [vmem:[%s2] sm:$0x1]
      %v265 = vlaneseq
      %v266 = vand.u32 %v265, 127
      %v267 = vperm.slane %v252, %v266
      %v268 = vadd.s32 %v266, 4294967288
      %v269 = vperm.slane %v253, %v268
      %vm270 = vcmask 130112
      %v271 = vsel %vm270, %v269, %v267
      %v272 = vadd.s32 %v266, 4294967280
      %v273 = vperm.slane %v254, %v272
      %vm274 = vcmask 195712
      %v275 = vsel %vm274, %v273, %v271
      %v276 = vadd.s32 %v266, 4294967272
      %v277 = vperm.slane %v255, %v276
      %vm278 = vcmask 261312
      %v279 = vsel %vm278, %v277, %v275
      %vm280 = vcmask 261120
      %v281 = vsel %vm280, %v279, 0
      %283 = vmatpush.msra.mxu0 0.0
      %284 = vmatpush.msra.mxu0 0.0
      %285 = vmatpush.msra.mxu0 0.0
      %286 = vmatpush.msra.mxu0 0.0
      %287 = vmatpush.msra.mxu0 0.0
      %288 = vmatpush.msra.mxu0 0.0
      %289 = vmatpush.msra.mxu0 0.0
      %290 = vmatpush.msra.mxu0 0.0
      %291 = vmatpush.msra.mxu0 0.0
      %292 = vmatpush.msra.mxu0 0.0
      %293 = vmatpush.msra.mxu0 0.0
      %294 = vmatpush.msra.mxu0 0.0
      %295 = vmatpush.msra.mxu0 %v259
      %296 = vmatpush.msra.mxu0 %v258
      %297 = vmatpush.msra.mxu0 %v257
      %298 = vmatpush.msra.mxu0 %v256
      %299 = vmatmul.f32.gmra.mxu0 %v281
      %v300 = vpop.f32.mrf.mxu0
      %v301 = vadd.f32 %v260, %v300
      %302 = vdwg.mxu0
      %v303 = vmax.f32 %v301, 0.0
      %v304 = vld [vmem:[%s3] sm:$0xff]
      %v305 = vld [vmem:[%s4] sm:$0x1]
      %vm306 = vcmask 64512
      %v308 = vsel %vm306, %v303, 0
      %310 = vmatpush.msra.mxu0 0.0
      %311 = vmatpush.msra.mxu0 0.0
      %312 = vmatpush.msra.mxu0 0.0
      %313 = vmatpush.msra.mxu0 0.0
      %314 = vmatpush.msra.mxu0 0.0
      %315 = vmatpush.msra.mxu0 0.0
      %316 = vmatpush.msra.mxu0 0.0
      %317 = vmatpush.msra.mxu0 0.0
      %318 = vmatpush.msra.mxu0 0.0
      %319 = vmatpush.msra.mxu0 0.0
      %320 = vmatpush.msra.mxu0 0.0
      %321 = vmatpush.msra.mxu0 0.0
      %322 = vmatpush.msra.mxu0 0.0
      %323 = vmatpush.msra.mxu0 0.0
      %324 = vmatpush.msra.mxu0 0.0
      %325 = vmatpush.msra.mxu0 %v304
      %326 = vmatmul.f32.gmra.mxu0 %v308
      %v327 = vpop.f32.mrf.mxu0
      %v328 = vadd.f32 %v305, %v327
      %329 = vdwg.mxu0
      %v330 = vxor.u32 %v328, 2147483648
      %v331 = vmul.f32 %v330, 1.442695
      %v332 = vpow.pop %v331
      %v333 = vadd.f32 %v332, 1.0
      %v334 = vrcp.pop %v333
      %v335 = vmul.f32 %v333, %v334
      %v336 = vsub.f32 1.0, %v335
      %v337 = vmul.f32 %v334, %v336
      %v338 = vadd.f32 %v334, %v337
      %vm339 = vweird.f32 %v333
      %vm340 = vweird.f32 %v334
      %vm341 = vmor %vm339, %vm340
      %v342 = vsel %vm341, %v334, %v338
      %v343 = vand.u32 2147483647, %v333
      %vm344 = vcmp.eq.f32.partialorder %v343, 8.507059e+37
      %v345 = vand.u32 %v333, 2147483648
      %v346 = vor.u32 1.1754944e-38, %v345
      %v347 = vsel %vm344, %v346, %v342
      %v348 = vmul.f32 1.0, %v347
      %v349 = vperm.slane %v348, 0
      %v350 = vlaneseq
      %v351 = vshrl.u32 %v350, 7
      %353 = vset.pattern.permute.xlu0 %v351
      %354 = vperm.xlu0 %353, %v349
      %v355 = vpop.permute.xlu0 %354
      %v356 = vlaneseq
      %v357 = vshrl.u32 %v356, 7
      %v358 = vadd.s32 %v357, 8
      %359 = vset.pattern.permute.xlu0 %v358
      %360 = vperm.xlu0 %359, %v349
      %v361 = vpop.permute.xlu0 %360
      %v362 = vlaneseq
      %v363 = vshrl.u32 %v362, 7
      %v364 = vadd.s32 %v363, 16
      %365 = vset.pattern.permute.xlu0 %v364
      %366 = vperm.xlu0 %365, %v349
      %v367 = vpop.permute.xlu0 %366
      %v368 = vlaneseq
      %v369 = vshrl.u32 %v368, 7
      %v370 = vadd.s32 %v369, 24
      %371 = vset.pattern.permute.xlu0 %v370
      %372 = vperm.xlu0 %371, %v349
      %v373 = vpop.permute.xlu0 %372
      %v374 = vmul.f32 %v225, %v355
      %v375 = vmul.f32 %v226, %v355
      %v376 = vmul.f32 %v227, %v361
      %v377 = vmul.f32 %v228, %v361
      %v378 = vmul.f32 %v229, %v367
      %v379 = vmul.f32 %v230, %v367
      %v380 = vmul.f32 %v231, %v373
      %v381 = vmul.f32 %v232, %v373
      %382 = vst [vmem:[%s224] sm:$0xff] %v374
      %383 = vst [vmem:[%s224 + $0x8] sm:$0xff] %v375
      %384 = vst [vmem:[%s224 + $0x10] sm:$0xff] %v376
      %385 = vst [vmem:[%s224 + $0x18] sm:$0xff] %v377
      %386 = vst [vmem:[%s224 + $0x20] sm:$0xff] %v378
      %387 = vst [vmem:[%s224 + $0x28] sm:$0xff] %v379
      %388 = vst [vmem:[%s224 + $0x30] sm:$0xff] %v380
      %389 = vst [vmem:[%s224 + $0x38] sm:$0xff] %v381
      %p390 = scmp.lt.s32.totalorder %s16, 1
      %s391 = scalar_select %p390, %s16, 1
      %s392 = smul.addr %s391, 8
      %s393 = smul.addr %s392, 8
      %s394 = scalar_lea.vmem %s5, %s393
      // Predicated region
      $region41: #{se_module.1} parent=39 // pred_check
        %p395 = pneg %p144
      $region42: #{se_module.1} parent=39 // pred_check_branch
        %397 = sbr.rel (%p395) target = $region44
      $region43: #{se_module.1} parent=39 // pred_region
        _
      $region44: #{se_module.1} parent=39 // pred_fallthru
        _
    $region40: #{se_module.1} parent=5 // pred_fallthru
      _
    %p398 = scmp.le.s32.totalorder 2, %s11
    // Predicated region
    $region45: #{se_module.1} parent=5 // pred_check
      %p399 = pneg %p398
    $region46: #{se_module.1} parent=5 // pred_check_branch
      %401 = sbr.rel (%p399) target = $region48
    $region47: #{se_module.1} parent=5 // pred_region
      %s402 = ssub.s32 %s11, 2
      // Predicated region
      $region49: #{se_module.1} parent=47 // pred_check
        %p403 = pneg %p150
      $region50: #{se_module.1} parent=47 // pred_check_branch
        %405 = sbr.rel (%p403) target = $region52
      $region51: #{se_module.1} parent=47 // pred_region
        %p406 = scmp.lt.s32.totalorder %s17, 1
        %s407 = scalar_select %p406, %s17, 1
        %s408 = smul.addr %s407, 8
        %s409 = smul.addr %s408, 8
        %s410 = scalar_lea.vmem %s5, %s409
      $region52: #{se_module.1} parent=47 // pred_fallthru
        _
    $region48: #{se_module.1} parent=5 // pred_fallthru
      _
  $region6: #{se_module.1} parent=0 // loop_footer
    %s15 = sadd.s32 1, %s11
  $region7: #{se_module.1} parent=0 // loop_footer_branch
    %10 = sbr.rel target = $region3
  $region8: #{se_module.1} parent=0 // loop_exit
    _

</llo_original>
